<compile_context>
chip_gen: v7x
topology: tpu7x:2x2x1
jax: 0.10.0
libtpu: 0.0.40
codegen_flags: <defaults>
</compile_context>

<pallas_src>
import jax
import jax.numpy as jnp
from jax.experimental import pallas as pl
from jax.experimental.pallas import tpu as pltpu


def _round_up(x, m):
    return (x + m - 1) // m * m


def _sublane(dtype):
    # 8 rows for 32-bit dtypes, 16 for 16-bit (packed sublanes).
    return 8 if jnp.dtype(dtype).itemsize >= 4 else 16


# ---------------------------------------------------------------------------
# Stage 1: column-sum of W over out_features  ->  (1, IN) in f32
#   grid = (IN_tiles, OUT_tiles); OUT is the reduction ("arbitrary") axis,
#   the (1, tile_in) output block is fixed across it (accumulator pattern).
# ---------------------------------------------------------------------------
def _make_wsum_kernel(out_rows, tile_out, need_mask):
    def kernel(w_ref, o_ref):
        k = pl.program_id(1)

        @pl.when(k == 0)
        def _():
            o_ref[...] = jnp.zeros_like(o_ref)

        w = w_ref[...].astype(jnp.float32)
        if need_mask:
            # Ragged last OUT block: zero the out-of-bounds rows before the
            # sublane reduction (OOB reads are unspecified data).
            row = jax.lax.broadcasted_iota(jnp.int32, w.shape, 0)
            w = jnp.where(row + k * tile_out < out_rows, w, 0.0)
        o_ref[...] = o_ref[...] + jnp.sum(w, axis=0, keepdims=True)

    return kernel


def _w_column_sum(W, tile_in, tile_out):
    OUT, IN = W.shape
    sub_w = _sublane(W.dtype)
    tile_out = max(sub_w, min(_round_up(tile_out, sub_w), _round_up(OUT, sub_w)))
    need_mask = (OUT % tile_out) != 0

    grid = (pl.cdiv(IN, tile_in), pl.cdiv(OUT, tile_out))

    itemsize = jnp.dtype(W.dtype).itemsize
    w_block_bytes = tile_out * tile_in * itemsize
    vmem_needed = 2 * w_block_bytes + 2 * tile_in * 4 + (1 << 20)
    cp_kwargs = dict(dimension_semantics=("parallel", "arbitrary"))
    if vmem_needed > (16 << 20):
        cp_kwargs["vmem_limit_bytes"] = min(vmem_needed + (4 << 20), 60 << 20)

    return pl.pallas_call(
        _make_wsum_kernel(OUT, tile_out, need_mask),
        out_shape=jax.ShapeDtypeStruct((1, IN), jnp.float32),
        grid=grid,
        in_specs=[pl.BlockSpec((tile_out, tile_in), lambda j, k: (k, j))],
        out_specs=pl.BlockSpec((1, tile_in), lambda j, k: (0, j)),
        compiler_params=pltpu.CompilerParams(**cp_kwargs),
    )(W)


# ---------------------------------------------------------------------------
# Stage 2: streaming elementwise multiply  out[b, i] = x[b, i] * w_sum[i]
# ---------------------------------------------------------------------------
def _linear_kernel(x_ref, wsum_ref, o_ref):
    x = x_ref[...]
    w = wsum_ref[...].astype(x.dtype)   # no per-element upcast on bf16 paths
    o_ref[...] = (x * w).astype(o_ref.dtype)


def linear_forward(x, W, *, tile_b=512, tile_in=512, tile_out=1024):
    """out[b, i] = x[b, i] * sum_o W[o, i]  (matches einsum 'bi,oi->bi')."""
    B, IN = x.shape
    OUT, IN_w = W.shape
    assert IN == IN_w, "in_features mismatch"

    sub = _sublane(x.dtype)

    # Clamp + align tile sizes to the problem (no divisibility requirement on
    # the array itself; Pallas masks ragged edge blocks).
    tile_b = max(sub, min(_round_up(tile_b, sub), _round_up(B, sub)))
    tile_in = max(128, min(_round_up(tile_in, 128), _round_up(IN, 128)))

    # v7x has 2 TensorCores: make sure the "parallel" grid has >= 2 steps when
    # the batch is big enough to split.
    if pl.cdiv(B, tile_b) * pl.cdiv(IN, tile_in) == 1 and B >= 2 * sub:
        tile_b = _round_up(pl.cdiv(B, 2), sub)

    # Stage 1: reduce W once. For tiny W, a Pallas round-trip is pure launch
    # overhead, so fold it into XLA.
    if OUT * IN <= (1 << 16):
        w_sum = jnp.sum(W.astype(jnp.float32), axis=0, keepdims=True)
    else:
        w_sum = _w_column_sum(W, tile_in, tile_out)  # (1, IN) f32

    # Stage 2: memory-bound streaming multiply.
    # Feature axis OUTER, batch INNER -> the (1, tile_in) w_sum block stays
    # resident across the whole batch sweep.
    grid = (pl.cdiv(IN, tile_in), pl.cdiv(B, tile_b))

    itemsize = jnp.dtype(x.dtype).itemsize
    cost = pl.CostEstimate(
        flops=int(B) * int(IN),
        transcendentals=0,
        bytes_accessed=2 * int(B) * int(IN) * itemsize + int(IN) * 4,
    )

    block_bytes = tile_b * tile_in * itemsize
    vmem_needed = 2 * 2 * block_bytes + 2 * tile_in * 4 + (1 << 20)
    cp_kwargs = dict(dimension_semantics=("parallel", "parallel"))
    if vmem_needed > (16 << 20):
        cp_kwargs["vmem_limit_bytes"] = min(vmem_needed + (4 << 20), 60 << 20)

    return pl.pallas_call(
        _linear_kernel,
        out_shape=jax.ShapeDtypeStruct((B, IN), x.dtype),
        grid=grid,
        in_specs=[
            pl.BlockSpec((tile_b, tile_in), lambda j, i: (i, j)),   # x
            pl.BlockSpec((1, tile_in), lambda j, i: (0, j)),        # w_sum
        ],
        out_specs=pl.BlockSpec((tile_b, tile_in), lambda j, i: (i, j)),
        compiler_params=pltpu.CompilerParams(**cp_kwargs),
        cost_estimate=cost,
    )(x, w_sum)


def init_linear_params(key, in_features, out_features, dtype=jnp.float32):
    # Matches torch.nn.init.trunc_normal_(W, a=-3.0, b=3.0): std-normal
    # truncated to [-3, 3], shape (out_features, in_features).
    W = jax.random.truncated_normal(
        key, -3.0, 3.0, (out_features, in_features), dtype=jnp.float32
    ).astype(dtype)
    return W


if __name__ == "__main__":
    key = jax.random.PRNGKey(0)
    k_x1, k_w1, k_x2, k_w2 = jax.random.split(key, 4)

    # Case A: tiny, exactly-tiled shapes (stage 1 folded into XLA).
    B, IN, OUT = 8, 128, 32
    x = jax.random.normal(k_x1, (B, IN), dtype=jnp.float32)
    W = init_linear_params(k_w1, IN, OUT, dtype=jnp.float32)
    out = jax.block_until_ready(linear_forward(x, W))
    ref = jnp.einsum("bi,oi->bi", x, W)
    assert out.shape == (B, IN)
    assert jnp.allclose(out, ref, atol=1e-4, rtol=1e-4), "case A mismatch"

    # Case B: ragged B / IN / OUT — exercises both Pallas kernels, ragged edge
    # blocks, and the masked OUT-axis accumulation path.
    B2, IN2, OUT2 = 133, 300, 272
    x2 = jax.random.normal(k_x2, (B2, IN2), dtype=jnp.float32)
    W2 = init_linear_params(k_w2, IN2, OUT2, dtype=jnp.float32)
    out2 = jax.block_until_ready(linear_forward(x2, W2, tile_out=128))
    ref2 = jnp.einsum("bi,oi->bi", x2, W2)
    assert out2.shape == (B2, IN2)
    assert jnp.allclose(out2, ref2, atol=1e-3, rtol=1e-3), "case B mismatch"

    print("KERNEL_OK")
</pallas_src>

<mosaic_0001>
module attributes {stable_mosaic.version = 11 : i64} {
  func.func @_linear_kernel(%arg0: i32, %arg1: i32, %arg2: memref<8x128xf32, #tpu.memory_space<vmem>>, %arg3: memref<1x128xf32, #tpu.memory_space<vmem>>, %arg4: memref<8x128xf32, #tpu.memory_space<vmem>>) attributes {dimension_semantics = [#tpu.dimension_semantics<parallel>, #tpu.dimension_semantics<parallel>], iteration_bounds = array<i64: 1, 1>, scalar_prefetch = 0 : i64, scratch_operands = 0 : i64, tpu.core_type = #tpu.core_type<tc>, window_params = [{transform_indices = @transform_0, window_bounds = array<i64: 8, 128>}, {transform_indices = @transform_1, window_bounds = array<i64: 1, 128>}, {transform_indices = @transform_2, window_bounds = array<i64: 8, 128>}]} {
    %c0 = arith.constant 0 : index
    %c0_0 = arith.constant 0 : index
    %0 = vector.load %arg2[%c0, %c0_0] : memref<8x128xf32, #tpu.memory_space<vmem>>, vector<8x128xf32>
    %c0_1 = arith.constant 0 : index
    %c0_2 = arith.constant 0 : index
    %1 = vector.load %arg3[%c0_1, %c0_2] : memref<1x128xf32, #tpu.memory_space<vmem>>, vector<1x128xf32>
    %2 = vector.broadcast %1 : vector<1x128xf32> to vector<8x128xf32>
    %3 = arith.mulf %0, %2 : vector<8x128xf32>
    %c0_3 = arith.constant 0 : index
    %c0_4 = arith.constant 0 : index
    %4 = vector.load %arg4[%c0_3, %c0_4] : memref<8x128xf32, #tpu.memory_space<vmem>>, vector<8x128xf32>
    tpu.vector_store %arg4[%c0_3, %c0_4], %3 {strides = array<i32>} : memref<8x128xf32, #tpu.memory_space<vmem>>, vector<8x128xf32>,
    return
  }
  func.func @transform_0(%arg0: i32, %arg1: i32) -> (i32, i32) {
    %c0_i32 = arith.constant 0 : i32
    return %arg1, %arg0 : i32, i32
  }
  func.func @transform_1(%arg0: i32, %arg1: i32) -> (i32, i32) {
    %c0_i32 = arith.constant 0 : i32
    %c0_i32_0 = arith.constant 0 : i32
    return %c0_i32, %arg0 : i32, i32
  }
  func.func @transform_2(%arg0: i32, %arg1: i32) -> (i32, i32) {
    %c0_i32 = arith.constant 0 : i32
    return %arg1, %arg0 : i32, i32
  }
}

</mosaic_0001>

<llo_original>
// kernel: tpu_custom_call.1
$region0: #{tpu_custom_call.1}
  #allocation0 [shape = 'u32[]', space=smem, size = 0x4, offset = 0x4, fixed_abs, tag = 'smem constant byte address 0x4 - core index']
  #allocation1 [shape = 'u32[144,128]{1,0:T(1,128)}', space=vmem, size = 0x12000, scoped, tag = 'internal scratch']
  %s0 = inlined_call_operand.hbm [shape: f32[8,128], index: 0, kind: input, shape index: {}]
  %s1 = inlined_call_operand.vmem [shape: f32[1,128], index: 1, kind: input, shape index: {}]
  %s2 = inlined_call_operand.hbm [shape: f32[8,128], index: 2, kind: output, shape index: {}]
  %s3 = sld [smem:[#allocation0]]
  $region22: #{tpu_custom_call.1} parent=0
    _
  %s5 = ssub.s32 1, %s3
  %s6 = scalar_select 0, %s5, %s3
  $region1: #{tpu_custom_call.1} parent=0
    #allocation2 [shape = 'u8[4096]{0}', space=vmem, size = 0x1000, scoped, tag = 'input window, operand 0, single buffered']
    #allocation3 [shape = 's32[1]{0}', space=sflag, size = 0x4, scoped, tag = 'scoped memory for tpu_custom_call.1']
    #allocation4 [shape = 's32[1]{0}', space=sflag, size = 0x4, scoped, tag = 'scoped memory for tpu_custom_call.1']
    #allocation5 [shape = 'u8[4096]{0}', space=vmem, size = 0x1000, scoped, tag = 'output window, operand 0, single buffered']
    %7 = vsyncpa [#allocation3], 0
    %8 = vsyncpa [#allocation4], 0
    // Predicated region
    $region2: #{tpu_custom_call.1} parent=1 // pred_check
      _
    $region3: #{tpu_custom_call.1} parent=1 // pred_check_branch
      %10 = sbr.rel (0) target = $region5
    $region4: #{tpu_custom_call.1} parent=1 // pred_region
      %s12 = ssub.s32 128, 128
      %13 = vsyncadd [#allocation3], %s12
      %s15 = sshll.u32 [#allocation2], 4
      %s16 = int_to_ptr.vmem [resolvable:$true] %s15
      %18 = dma.hbm_to_vmem [thread:$0]  %s0, 128, %s16, [#allocation3]
    $region5: #{tpu_custom_call.1} parent=1 // pred_fallthru
      _
    // Predicated region
    $region6: #{tpu_custom_call.1} parent=1 // pred_check
      _
    $region7: #{tpu_custom_call.1} parent=1 // pred_check_branch
      %20 = sbr.rel (0) target = $region9
    $region8: #{tpu_custom_call.1} parent=1 // pred_region
      _
    $region9: #{tpu_custom_call.1} parent=1 // pred_fallthru
      _
    // Predicated region
    $region10: #{tpu_custom_call.1} parent=1 // pred_check
      _
    $region11: #{tpu_custom_call.1} parent=1 // pred_check_branch
      %22 = sbr.rel (0) target = $region13
    $region12: #{tpu_custom_call.1} parent=1 // pred_region
      %23 = dma.done [#allocation3], 128
    $region13: #{tpu_custom_call.1} parent=1 // pred_fallthru
      _
    %v24 = vld [vmem:[#allocation2] sm:$0xff]
    %v25 = vld [vmem:[%s1] sm:$0x1]
    %v27 = vlaneseq
    %v28 = vshrl.u32 %v27, 7
    %v29 = vsub.s32 0, %v28
    %v30 = vrot.slane %v25, %v29
    %v32 = vmul.f32 %v24, %v30
    %33 = vst [vmem:[#allocation5] sm:$0xff] %v32
    // Predicated region
    $region14: #{tpu_custom_call.1} parent=1 // pred_check
      _
    $region15: #{tpu_custom_call.1} parent=1 // pred_check_branch
      %35 = sbr.rel (0) target = $region17
    $region16: #{tpu_custom_call.1} parent=1 // pred_region
      %s37 = ssub.s32 128, 128
      %38 = vsyncadd [#allocation4], %s37
      %s40 = sshll.u32 [#allocation5], 4
      %s41 = int_to_ptr.vmem [resolvable:$true] %s40
      %43 = dma.vmem_to_hbm [thread:$0]  %s41, 128, %s2, [#allocation4]
    $region17: #{tpu_custom_call.1} parent=1 // pred_fallthru
      _
    // Predicated region
    $region18: #{tpu_custom_call.1} parent=1 // pred_check
      _
    $region19: #{tpu_custom_call.1} parent=1 // pred_check_branch
      %45 = sbr.rel (0) target = $region21
    $region20: #{tpu_custom_call.1} parent=1 // pred_region
      %46 = dma.done [#allocation4], 128
    $region21: #{tpu_custom_call.1} parent=1 // pred_fallthru
      _
    %47 = vsyncpa [#allocation3], 1
    %48 = vsyncpa [#allocation4], 1

</llo_original>
